<compile_context>
chip_gen: v5e
topology: v5e:2x2
jax: 0.10.0
libtpu: 0.0.40
codegen_flags: <defaults>
</compile_context>

<pallas_src>
import math
from functools import partial

import jax
import jax.numpy as jnp
from jax import lax
from jax.experimental import pallas as pl
from jax.experimental.pallas import tpu as pltpu


_VMEM_LIMIT = 32 * 1024 * 1024   # explicit scoped-VMEM budget; raise for big D/F


# ----------------------------------------------------------------------------
# helpers
# ----------------------------------------------------------------------------
def _row_tile(M, max_tile=512):
    """Row tile that divides M, is a multiple of 8 (the (8,128) rule), is at
    most `max_tile`, and -- when possible -- leaves >= 2 grid steps so both
    v7x TensorCores get work (neutral on single-TC v5e/v6e)."""
    if M <= 8 or M % 8 != 0:
        return M
    cap = max(8, min(max_tile, M // 2))
    best = 8
    for t in range(8, cap + 1, 8):
        if M % t == 0:
            best = t
    return best


# ----------------------------------------------------------------------------
# Fused attention block:  y = LayerNorm(x + OutProj(MHA(x, kv, kv)))
# one grid step per batch element; all heads handled inside the step.
# ----------------------------------------------------------------------------
def _attn_block_kernel(*refs, nhead, eps, self_attn):
    if self_attn:
        (x_ref, wq_ref, wkv_ref, bq_ref, bkv_ref, wo_ref, bo_ref,
         g_ref, b_ref, o_ref, ctx_scr) = refs
    else:
        (x_ref, kv_ref, wq_ref, wkv_ref, bq_ref, bkv_ref, wo_ref, bo_ref,
         g_ref, b_ref, o_ref, ctx_scr) = refs

    x = x_ref[0]                                   # (T, D) f32
    kv = x if self_attn else kv_ref[0]             # (S, D) f32
    T, D = x.shape
    dh = D // nhead
    scale = 1.0 / math.sqrt(dh)

    x_bf = x.astype(jnp.bfloat16)
    kv_bf = x_bf if self_attn else kv.astype(jnp.bfloat16)

    # Projections (bf16 MXU, f32 accumulate) -- no wasted columns:
    #   q only from the target tokens, k/v only from the kv source.
    q = jnp.dot(x_bf, wq_ref[...], preferred_element_type=jnp.float32) + bq_ref[...]
    kvp = jnp.dot(kv_bf, wkv_ref[...], preferred_element_type=jnp.float32) + bkv_ref[...]

    q_bf = (q * scale).astype(jnp.bfloat16)        # (T, D)
    k_bf = kvp[:, :D].astype(jnp.bfloat16)         # (S, D)
    v_bf = kvp[:, D:].astype(jnp.bfloat16)         # (S, D)

    # Per-head attention; head contexts are concatenated into a bf16 (T, D)
    # VMEM scratch so the out-projection is a single K=D MXU pass.
    # TODO(synk): a head-batched dot_general ((nhead,T,dh) layout) would remove
    #             the per-head lane slices but needs a lane-splitting reshape.
    for h in range(nhead):
        lo = h * dh
        qh = q_bf[:, lo:lo + dh]                   # (T, dh)
        kh = k_bf[:, lo:lo + dh]                   # (S, dh)
        vh = v_bf[:, lo:lo + dh]                   # (S, dh)
        # scores: contract last dims directly (no XLU transpose of K)
        s = lax.dot_general(qh, kh, (((1,), (1,)), ((), ())),
                            preferred_element_type=jnp.float32)   # (T, S) f32
        m = jnp.max(s, axis=-1, keepdims=True)
        p = jnp.exp(s - m)
        p = p / jnp.sum(p, axis=-1, keepdims=True)  # exact division (parity)
        ctx = jnp.dot(p.astype(jnp.bfloat16), vh,
                      preferred_element_type=jnp.float32)         # (T, dh)
        ctx_scr[:, lo:lo + dh] = ctx.astype(jnp.bfloat16)

    # single out-projection over the concatenated heads
    attn_out = jnp.dot(ctx_scr[...], wo_ref[...],
                       preferred_element_type=jnp.float32) + bo_ref[...]

    # residual + LayerNorm (f32 statistics)
    y = x + attn_out
    mu = jnp.mean(y, axis=-1, keepdims=True)
    var = jnp.mean(jnp.square(y - mu), axis=-1, keepdims=True)
    o_ref[0] = (y - mu) * lax.rsqrt(var + eps) * g_ref[...] + b_ref[...]


def attn_block(x, kv, p, ln_g, ln_b, nhead, eps=1e-5, self_attn=False):
    # x: (B, T, D), kv: (B, S, D)
    B, T, D = x.shape
    S = T if self_attn else kv.shape[1]

    w_specs = [
        pl.BlockSpec((D, D), lambda b: (0, 0)),        # Wq  (bf16)
        pl.BlockSpec((D, 2 * D), lambda b: (0, 0)),    # Wkv (bf16)
        pl.BlockSpec((1, D), lambda b: (0, 0)),        # bq
        pl.BlockSpec((1, 2 * D), lambda b: (0, 0)),    # bkv
        pl.BlockSpec((D, D), lambda b: (0, 0)),        # Wo  (bf16)
        pl.BlockSpec((1, D), lambda b: (0, 0)),        # bo
        pl.BlockSpec((1, D), lambda b: (0, 0)),        # ln gamma
        pl.BlockSpec((1, D), lambda b: (0, 0)),        # ln beta
    ]
    x_spec = pl.BlockSpec((1, T, D), lambda b: (b, 0, 0))
    weights = (p["wq"], p["wkv"], p["bq"], p["bkv"], p["wo"], p["bo"], ln_g, ln_b)
    if self_attn:
        in_specs = [x_spec] + w_specs
        args = (x,) + weights
    else:
        in_specs = [x_spec, pl.BlockSpec((1, S, D), lambda b: (b, 0, 0))] + w_specs
        args = (x, kv) + weights

    cost = pl.CostEstimate(
        flops=int(2 * B * (2 * T * D * D + 2 * S * D * D + 2 * T * S * D)),
        transcendentals=int(B * nhead * T * S),
        bytes_accessed=int(2 * 4 * D * D + 4 * 6 * D + 4 * 2 * B * T * D
                           + (0 if self_attn else 4 * B * S * D)),
    )
    # TODO(synk): when B == 1, add a query-tile grid axis so both v7x
    #             TensorCores get work (grid of size 1 leaves one TC idle).
    return pl.pallas_call(
        partial(_attn_block_kernel, nhead=nhead, eps=eps, self_attn=self_attn),
        out_shape=jax.ShapeDtypeStruct((B, T, D), jnp.float32),
        grid=(B,),
        in_specs=in_specs,
        out_specs=pl.BlockSpec((1, T, D), lambda b: (b, 0, 0)),
        scratch_shapes=[pltpu.VMEM((T, D), jnp.bfloat16)],
        compiler_params=pltpu.CompilerParams(
            dimension_semantics=("parallel",),
            vmem_limit_bytes=_VMEM_LIMIT),
        cost_estimate=cost,
    )(*args)


# ----------------------------------------------------------------------------
# Fused FFN block:  y = LayerNorm(x + W2 · relu(W1 · x + b1) + b2)
# row-tiled over B*T, weights fully resident, bf16 matmuls.
# ----------------------------------------------------------------------------
def _ffn_block_kernel(x_ref, w1_ref, b1_ref, w2_ref, b2_ref, g_ref, b_ref,
                      o_ref, *, eps):
    x = x_ref[...]                                                  # (tm, D) f32
    h = jnp.dot(x.astype(jnp.bfloat16), w1_ref[...],
                preferred_element_type=jnp.float32) + b1_ref[...]
    h = jnp.maximum(h, 0.0)
    y = jnp.dot(h.astype(jnp.bfloat16), w2_ref[...],
                preferred_element_type=jnp.float32) + b2_ref[...]
    y = x + y
    mu = jnp.mean(y, axis=-1, keepdims=True)
    var = jnp.mean(jnp.square(y - mu), axis=-1, keepdims=True)
    o_ref[...] = (y - mu) * lax.rsqrt(var + eps) * g_ref[...] + b_ref[...]


def ffn_block(x2d, p, ln_g, ln_b, eps=1e-5):
    M, D = x2d.shape
    F = p["w1"].shape[1]
    tm = _row_tile(M)
    cost = pl.CostEstimate(
        flops=int(4 * M * D * F),
        transcendentals=0,
        bytes_accessed=int(2 * 2 * D * F + 4 * (F + 3 * D) + 4 * 2 * M * D),
    )
    return pl.pallas_call(
        partial(_ffn_block_kernel, eps=eps),
        out_shape=jax.ShapeDtypeStruct((M, D), jnp.float32),
        grid=(M // tm,),
        in_specs=[
            pl.BlockSpec((tm, D), lambda i: (i, 0)),
            pl.BlockSpec((D, F), lambda i: (0, 0)),     # W1 (bf16)
            pl.BlockSpec((1, F), lambda i: (0, 0)),     # b1
            pl.BlockSpec((F, D), lambda i: (0, 0)),     # W2 (bf16)
            pl.BlockSpec((1, D), lambda i: (0, 0)),     # b2
            pl.BlockSpec((1, D), lambda i: (0, 0)),     # ln gamma
            pl.BlockSpec((1, D), lambda i: (0, 0)),     # ln beta
        ],
        out_specs=pl.BlockSpec((tm, D), lambda i: (i, 0)),
        compiler_params=pltpu.CompilerParams(
            dimension_semantics=("parallel",),
            vmem_limit_bytes=_VMEM_LIMIT),
        cost_estimate=cost,
    )(x2d, p["w1"], p["b1"], p["w2"], p["b2"], ln_g, ln_b)


# ----------------------------------------------------------------------------
# Final LayerNorm (row-tiled, f32)
# ----------------------------------------------------------------------------
def _layernorm_kernel(x_ref, g_ref, b_ref, o_ref, *, eps):
    x = x_ref[...]
    mu = jnp.mean(x, axis=-1, keepdims=True)
    var = jnp.mean(jnp.square(x - mu), axis=-1, keepdims=True)
    o_ref[...] = (x - mu) * lax.rsqrt(var + eps) * g_ref[...] + b_ref[...]


def layernorm(x2d, g, b, eps=1e-5):
    M, D = x2d.shape
    tm = _row_tile(M)
    return pl.pallas_call(
        partial(_layernorm_kernel, eps=eps),
        out_shape=jax.ShapeDtypeStruct((M, D), jnp.float32),
        grid=(M // tm,),
        in_specs=[
            pl.BlockSpec((tm, D), lambda i: (i, 0)),
            pl.BlockSpec((1, D), lambda i: (0, 0)),
            pl.BlockSpec((1, D), lambda i: (0, 0)),
        ],
        out_specs=pl.BlockSpec((tm, D), lambda i: (i, 0)),
        compiler_params=pltpu.CompilerParams(
            dimension_semantics=("parallel",),
            vmem_limit_bytes=_VMEM_LIMIT),
    )(x2d, g, b)


# ------------------------------ Model glue ---------------------------------
def decoder_layer_forward(x, memory, semantics, p, nhead):
    # x: (B, T, D), memory: (B, S, D), semantics: (B, Ss, D)
    B, T, D = x.shape
    x = attn_block(x, x, p["self"], p["ln1_g"], p["ln1_b"], nhead, self_attn=True)
    x = attn_block(x, memory, p["cross"], p["ln2_g"], p["ln2_b"], nhead)
    x = attn_block(x, semantics, p["sem"], p["ln3_g"], p["ln3_b"], nhead)
    x2 = ffn_block(x.reshape(B * T, D), p, p["ln4_g"], p["ln4_b"])
    return x2.reshape(B, T, D)


def transformer_decoder(tgt, memory, semantics, params, nhead):
    # tgt: (T, B, D), memory: (S, B, D), semantics: (Ss, B, D) -- PyTorch layout
    # Layout change happens exactly once, outside the layer loop.
    x = jnp.transpose(tgt, (1, 0, 2))
    mem = jnp.transpose(memory, (1, 0, 2))
    sem = jnp.transpose(semantics, (1, 0, 2))
    for layer_p in params["layers"]:
        x = decoder_layer_forward(x, mem, sem, layer_p, nhead)
    B, T, D = x.shape
    x = layernorm(x.reshape(B * T, D),
                  params["final_g"], params["final_b"]).reshape(B, T, D)
    return jnp.transpose(x, (1, 0, 2))


# --------------------------- Deterministic init ----------------------------
def _init_attn(key, D):
    ks = jax.random.split(key, 4)
    wq = 0.02 * jax.random.normal(ks[0], (D, D), jnp.float32)
    wk = 0.02 * jax.random.normal(ks[1], (D, D), jnp.float32)
    wv = 0.02 * jax.random.normal(ks[2], (D, D), jnp.float32)
    wo = 0.02 * jax.random.normal(ks[3], (D, D), jnp.float32)
    return {
        "wq": wq.astype(jnp.bfloat16),                                 # (D, D)
        "wkv": jnp.concatenate([wk, wv], axis=1).astype(jnp.bfloat16),  # (D, 2D)
        "bq": jnp.zeros((1, D), jnp.float32),
        "bkv": jnp.zeros((1, 2 * D), jnp.float32),
        "wo": wo.astype(jnp.bfloat16),
        "bo": jnp.zeros((1, D), jnp.float32),
    }


def init_params(key, num_layers, D, F):
    layers = []
    keys = jax.random.split(key, num_layers + 1)
    for l in range(num_layers):
        ks = jax.random.split(keys[l], 5)
        layers.append({
            "self": _init_attn(ks[0], D),
            "cross": _init_attn(ks[1], D),
            "sem": _init_attn(ks[2], D),
            "w1": (0.02 * jax.random.normal(ks[3], (D, F), jnp.float32)).astype(jnp.bfloat16),
            "b1": jnp.zeros((1, F), jnp.float32),
            "w2": (0.02 * jax.random.normal(ks[4], (F, D), jnp.float32)).astype(jnp.bfloat16),
            "b2": jnp.zeros((1, D), jnp.float32),
            "ln1_g": jnp.ones((1, D), jnp.float32), "ln1_b": jnp.zeros((1, D), jnp.float32),
            "ln2_g": jnp.ones((1, D), jnp.float32), "ln2_b": jnp.zeros((1, D), jnp.float32),
            "ln3_g": jnp.ones((1, D), jnp.float32), "ln3_b": jnp.zeros((1, D), jnp.float32),
            "ln4_g": jnp.ones((1, D), jnp.float32), "ln4_b": jnp.zeros((1, D), jnp.float32),
        })
    return {
        "layers": layers,
        "final_g": jnp.ones((1, D), jnp.float32),
        "final_b": jnp.zeros((1, D), jnp.float32),
    }


# --------------------------------- Main -------------------------------------
if __name__ == "__main__":
    B, T, S, SS = 2, 8, 8, 8          # batch, tgt seq, memory seq, semantics seq
    D, H, F, L = 128, 4, 256, 2       # d_model, heads, ffn dim, num_layers
    # D/F chosen lane-dense (multiples of 128) so every block uses full vregs.

    key = jax.random.PRNGKey(0)
    k1, k2, k3, kp = jax.random.split(key, 4)
    tgt = jax.random.normal(k1, (T, B, D), jnp.float32)
    memory = jax.random.normal(k2, (S, B, D), jnp.float32)
    semantics = jax.random.normal(k3, (SS, B, D), jnp.float32)

    params = init_params(kp, L, D, F)

    out = transformer_decoder(tgt, memory, semantics, params, nhead=H)
    out = jax.block_until_ready(out)
    assert out.shape == (T, B, D), out.shape
    assert bool(jnp.all(jnp.isfinite(out)))
    print("KERNEL_OK")
</pallas_src>

<mosaic_0001>
module attributes {stable_mosaic.version = 11 : i64} {
  func.func @_attn_block_kernel(%arg0: i32, %arg1: memref<1x8x128xf32, #tpu.memory_space<vmem>>, %arg2: memref<128x128xbf16, #tpu.memory_space<vmem>>, %arg3: memref<128x256xbf16, #tpu.memory_space<vmem>>, %arg4: memref<1x128xf32, #tpu.memory_space<vmem>>, %arg5: memref<1x256xf32, #tpu.memory_space<vmem>>, %arg6: memref<128x128xbf16, #tpu.memory_space<vmem>>, %arg7: memref<1x128xf32, #tpu.memory_space<vmem>>, %arg8: memref<1x128xf32, #tpu.memory_space<vmem>>, %arg9: memref<1x128xf32, #tpu.memory_space<vmem>>, %arg10: memref<1x8x128xf32, #tpu.memory_space<vmem>>, %arg11: memref<8x128xbf16, #tpu.memory_space<vmem>>) attributes {dimension_semantics = [#tpu.dimension_semantics<parallel>], iteration_bounds = array<i64: 2>, scalar_prefetch = 0 : i64, scratch_operands = 1 : i64, tpu.core_type = #tpu.core_type<tc>, window_params = [{transform_indices = @transform_0, window_bounds = array<i64: 1, 8, 128>}, {pipeline_mode = #tpu.pipeline_mode<synchronous>, transform_indices = @transform_1, window_bounds = array<i64: 128, 128>}, {pipeline_mode = #tpu.pipeline_mode<synchronous>, transform_indices = @transform_2, window_bounds = array<i64: 128, 256>}, {pipeline_mode = #tpu.pipeline_mode<synchronous>, transform_indices = @transform_3, window_bounds = array<i64: 1, 128>}, {pipeline_mode = #tpu.pipeline_mode<synchronous>, transform_indices = @transform_4, window_bounds = array<i64: 1, 256>}, {pipeline_mode = #tpu.pipeline_mode<synchronous>, transform_indices = @transform_5, window_bounds = array<i64: 128, 128>}, {pipeline_mode = #tpu.pipeline_mode<synchronous>, transform_indices = @transform_6, window_bounds = array<i64: 1, 128>}, {pipeline_mode = #tpu.pipeline_mode<synchronous>, transform_indices = @transform_7, window_bounds = array<i64: 1, 128>}, {pipeline_mode = #tpu.pipeline_mode<synchronous>, transform_indices = @transform_8, window_bounds = array<i64: 1, 128>}, {transform_indices = @transform_9, window_bounds = array<i64: 1, 8, 128>}]} {
    %c0 = arith.constant 0 : index
    %c0_0 = arith.constant 0 : index
    %c0_1 = arith.constant 0 : index
    %0 = vector.load %arg1[%c0, %c0_0, %c0_1] : memref<1x8x128xf32, #tpu.memory_space<vmem>>, vector<1x8x128xf32>
    %1 = vector.shape_cast %0 : vector<1x8x128xf32> to vector<8x128xf32>
    %2 = arith.truncf %1 : vector<8x128xf32> to vector<8x128xbf16>
    %c0_2 = arith.constant 0 : index
    %c0_3 = arith.constant 0 : index
    %3 = vector.load %arg2[%c0_2, %c0_3] : memref<128x128xbf16, #tpu.memory_space<vmem>>, vector<128x128xbf16>
    %cst = arith.constant dense<0.000000e+00> : vector<8x128xf32>
    %4 = tpu.matmul %2, %3, %cst {dimension_numbers = #tpu.dot_dimension_numbers<[1], [0], [0], [1], [0, 0, 1, 1], [], []>} : vector<8x128xbf16>, vector<128x128xbf16>, vector<8x128xf32> -> vector<8x128xf32>
    %c0_4 = arith.constant 0 : index
    %c0_5 = arith.constant 0 : index
    %5 = vector.load %arg4[%c0_4, %c0_5] : memref<1x128xf32, #tpu.memory_space<vmem>>, vector<1x128xf32>
    %6 = vector.broadcast %5 : vector<1x128xf32> to vector<8x128xf32>
    %7 = arith.addf %4, %6 : vector<8x128xf32>
    %c0_6 = arith.constant 0 : index
    %c0_7 = arith.constant 0 : index
    %8 = vector.load %arg3[%c0_6, %c0_7] : memref<128x256xbf16, #tpu.memory_space<vmem>>, vector<128x256xbf16>
    %cst_8 = arith.constant dense<0.000000e+00> : vector<8x256xf32>
    %9 = tpu.matmul %2, %8, %cst_8 {dimension_numbers = #tpu.dot_dimension_numbers<[1], [0], [0], [1], [0, 0, 1, 1], [], []>} : vector<8x128xbf16>, vector<128x256xbf16>, vector<8x256xf32> -> vector<8x256xf32>
    %c0_9 = arith.constant 0 : index
    %c0_10 = arith.constant 0 : index
    %10 = vector.load %arg5[%c0_9, %c0_10] : memref<1x256xf32, #tpu.memory_space<vmem>>, vector<1x256xf32>
    %11 = vector.broadcast %10 : vector<1x256xf32> to vector<8x256xf32>
    %12 = arith.addf %9, %11 : vector<8x256xf32>
    %cst_11 = arith.constant 0.176776692 : f32
    %13 = vector.broadcast %cst_11 : f32 to vector<8x128xf32>
    %14 = arith.mulf %7, %13 : vector<8x128xf32>
    %15 = arith.truncf %14 : vector<8x128xf32> to vector<8x128xbf16>
    %16 = vector.extract_strided_slice %12 {offsets = [0, 0], sizes = [8, 128], strides = [1, 1]} : vector<8x256xf32> to vector<8x128xf32>
    %17 = arith.truncf %16 : vector<8x128xf32> to vector<8x128xbf16>
    %18 = vector.extract_strided_slice %12 {offsets = [0, 128], sizes = [8, 128], strides = [1, 1]} : vector<8x256xf32> to vector<8x128xf32>
    %19 = arith.truncf %18 : vector<8x128xf32> to vector<8x128xbf16>
    %20 = vector.extract_strided_slice %15 {offsets = [0, 0], sizes = [8, 32], strides = [1, 1]} : vector<8x128xbf16> to vector<8x32xbf16>
    %21 = vector.extract_strided_slice %17 {offsets = [0, 0], sizes = [8, 32], strides = [1, 1]} : vector<8x128xbf16> to vector<8x32xbf16>
    %22 = vector.extract_strided_slice %19 {offsets = [0, 0], sizes = [8, 32], strides = [1, 1]} : vector<8x128xbf16> to vector<8x32xbf16>
    %cst_12 = arith.constant dense<0.000000e+00> : vector<8x8xf32>
    %23 = tpu.matmul %20, %21, %cst_12 {dimension_numbers = #tpu.dot_dimension_numbers<[1], [1], [0], [0], [0, 0, 1, 0], [], []>} : vector<8x32xbf16>, vector<8x32xbf16>, vector<8x8xf32> -> vector<8x8xf32>
    %cst_13 = arith.constant dense<0xFF800000> : vector<8xf32>
    %24 = vector.multi_reduction <maximumf>, %23, %cst_13 [1] : vector<8x8xf32> to vector<8xf32>
    %25 = vector.shape_cast %24 : vector<8xf32> to vector<8x1xf32>
    %26 = vector.broadcast %25 : vector<8x1xf32> to vector<8x8xf32>
    %27 = arith.subf %23, %26 : vector<8x8xf32>
    %28 = math.exp %27 : vector<8x8xf32>
    %cst_14 = arith.constant dense<0.000000e+00> : vector<8xf32>
    %29 = vector.multi_reduction <add>, %28, %cst_14 [1] : vector<8x8xf32> to vector<8xf32>
    %30 = vector.shape_cast %29 : vector<8xf32> to vector<8x1xf32>
    %31 = vector.broadcast %30 : vector<8x1xf32> to vector<8x8xf32>
    %32 = arith.divf %28, %31 : vector<8x8xf32>
    %33 = arith.truncf %32 : vector<8x8xf32> to vector<8x8xbf16>
    %cst_15 = arith.constant dense<0.000000e+00> : vector<8x32xf32>
    %34 = tpu.matmul %33, %22, %cst_15 {dimension_numbers = #tpu.dot_dimension_numbers<[1], [0], [0], [1], [0, 0, 1, 1], [], []>} : vector<8x8xbf16>, vector<8x32xbf16>, vector<8x32xf32> -> vector<8x32xf32>
    %35 = arith.truncf %34 : vector<8x32xf32> to vector<8x32xbf16>
    %c0_16 = arith.constant 0 : index
    %c0_17 = arith.constant 0 : index
    %36 = vector.load %arg11[%c0_16, %c0_17] : memref<8x128xbf16, #tpu.memory_space<vmem>>, vector<8x32xbf16>
    tpu.vector_store %arg11[%c0_16, %c0_17], %35 {strides = array<i32>} : memref<8x128xbf16, #tpu.memory_space<vmem>>, vector<8x32xbf16>,
    %37 = vector.extract_strided_slice %15 {offsets = [0, 32], sizes = [8, 32], strides = [1, 1]} : vector<8x128xbf16> to vector<8x32xbf16>
    %38 = vector.extract_strided_slice %17 {offsets = [0, 32], sizes = [8, 32], strides = [1, 1]} : vector<8x128xbf16> to vector<8x32xbf16>
    %39 = vector.extract_strided_slice %19 {offsets = [0, 32], sizes = [8, 32], strides = [1, 1]} : vector<8x128xbf16> to vector<8x32xbf16>
    %cst_18 = arith.constant dense<0.000000e+00> : vector<8x8xf32>
    %40 = tpu.matmul %37, %38, %cst_18 {dimension_numbers = #tpu.dot_dimension_numbers<[1], [1], [0], [0], [0, 0, 1, 0], [], []>} : vector<8x32xbf16>, vector<8x32xbf16>, vector<8x8xf32> -> vector<8x8xf32>
    %cst_19 = arith.constant dense<0xFF800000> : vector<8xf32>
    %41 = vector.multi_reduction <maximumf>, %40, %cst_19 [1] : vector<8x8xf32> to vector<8xf32>
    %42 = vector.shape_cast %41 : vector<8xf32> to vector<8x1xf32>
    %43 = vector.broadcast %42 : vector<8x1xf32> to vector<8x8xf32>
    %44 = arith.subf %40, %43 : vector<8x8xf32>
    %45 = math.exp %44 : vector<8x8xf32>
    %cst_20 = arith.constant dense<0.000000e+00> : vector<8xf32>
    %46 = vector.multi_reduction <add>, %45, %cst_20 [1] : vector<8x8xf32> to vector<8xf32>
    %47 = vector.shape_cast %46 : vector<8xf32> to vector<8x1xf32>
    %48 = vector.broadcast %47 : vector<8x1xf32> to vector<8x8xf32>
    %49 = arith.divf %45, %48 : vector<8x8xf32>
    %50 = arith.truncf %49 : vector<8x8xf32> to vector<8x8xbf16>
    %cst_21 = arith.constant dense<0.000000e+00> : vector<8x32xf32>
    %51 = tpu.matmul %50, %39, %cst_21 {dimension_numbers = #tpu.dot_dimension_numbers<[1], [0], [0], [1], [0, 0, 1, 1], [], []>} : vector<8x8xbf16>, vector<8x32xbf16>, vector<8x32xf32> -> vector<8x32xf32>
    %52 = arith.truncf %51 : vector<8x32xf32> to vector<8x32xbf16>
    %c0_22 = arith.constant 0 : index
    %c32 = arith.constant 32 : index
    %53 = vector.load %arg11[%c0_22, %c32] : memref<8x128xbf16, #tpu.memory_space<vmem>>, vector<8x32xbf16>
    tpu.vector_store %arg11[%c0_22, %c32], %52 {strides = array<i32>} : memref<8x128xbf16, #tpu.memory_space<vmem>>, vector<8x32xbf16>,
    %54 = vector.extract_strided_slice %15 {offsets = [0, 64], sizes = [8, 32], strides = [1, 1]} : vector<8x128xbf16> to vector<8x32xbf16>
    %55 = vector.extract_strided_slice %17 {offsets = [0, 64], sizes = [8, 32], strides = [1, 1]} : vector<8x128xbf16> to vector<8x32xbf16>
    %56 = vector.extract_strided_slice %19 {offsets = [0, 64], sizes = [8, 32], strides = [1, 1]} : vector<8x128xbf16> to vector<8x32xbf16>
    %cst_23 = arith.constant dense<0.000000e+00> : vector<8x8xf32>
    %57 = tpu.matmul %54, %55, %cst_23 {dimension_numbers = #tpu.dot_dimension_numbers<[1], [1], [0], [0], [0, 0, 1, 0], [], []>} : vector<8x32xbf16>, vector<8x32xbf16>, vector<8x8xf32> -> vector<8x8xf32>
    %cst_24 = arith.constant dense<0xFF800000> : vector<8xf32>
    %58 = vector.multi_reduction <maximumf>, %57, %cst_24 [1] : vector<8x8xf32> to vector<8xf32>
    %59 = vector.shape_cast %58 : vector<8xf32> to vector<8x1xf32>
    %60 = vector.broadcast %59 : vector<8x1xf32> to vector<8x8xf32>
    %61 = arith.subf %57, %60 : vector<8x8xf32>
    %62 = math.exp %61 : vector<8x8xf32>
    %cst_25 = arith.constant dense<0.000000e+00> : vector<8xf32>
    %63 = vector.multi_reduction <add>, %62, %cst_25 [1] : vector<8x8xf32> to vector<8xf32>
    %64 = vector.shape_cast %63 : vector<8xf32> to vector<8x1xf32>
    %65 = vector.broadcast %64 : vector<8x1xf32> to vector<8x8xf32>
    %66 = arith.divf %62, %65 : vector<8x8xf32>
    %67 = arith.truncf %66 : vector<8x8xf32> to vector<8x8xbf16>
    %cst_26 = arith.constant dense<0.000000e+00> : vector<8x32xf32>
    %68 = tpu.matmul %67, %56, %cst_26 {dimension_numbers = #tpu.dot_dimension_numbers<[1], [0], [0], [1], [0, 0, 1, 1], [], []>} : vector<8x8xbf16>, vector<8x32xbf16>, vector<8x32xf32> -> vector<8x32xf32>
    %69 = arith.truncf %68 : vector<8x32xf32> to vector<8x32xbf16>
    %c0_27 = arith.constant 0 : index
    %c64 = arith.constant 64 : index
    %70 = vector.load %arg11[%c0_27, %c64] : memref<8x128xbf16, #tpu.memory_space<vmem>>, vector<8x32xbf16>
    tpu.vector_store %arg11[%c0_27, %c64], %69 {strides = array<i32>} : memref<8x128xbf16, #tpu.memory_space<vmem>>, vector<8x32xbf16>,
    %71 = vector.extract_strided_slice %15 {offsets = [0, 96], sizes = [8, 32], strides = [1, 1]} : vector<8x128xbf16> to vector<8x32xbf16>
    %72 = vector.extract_strided_slice %17 {offsets = [0, 96], sizes = [8, 32], strides = [1, 1]} : vector<8x128xbf16> to vector<8x32xbf16>
    %73 = vector.extract_strided_slice %19 {offsets = [0, 96], sizes = [8, 32], strides = [1, 1]} : vector<8x128xbf16> to vector<8x32xbf16>
    %cst_28 = arith.constant dense<0.000000e+00> : vector<8x8xf32>
    %74 = tpu.matmul %71, %72, %cst_28 {dimension_numbers = #tpu.dot_dimension_numbers<[1], [1], [0], [0], [0, 0, 1, 0], [], []>} : vector<8x32xbf16>, vector<8x32xbf16>, vector<8x8xf32> -> vector<8x8xf32>
    %cst_29 = arith.constant dense<0xFF800000> : vector<8xf32>
    %75 = vector.multi_reduction <maximumf>, %74, %cst_29 [1] : vector<8x8xf32> to vector<8xf32>
    %76 = vector.shape_cast %75 : vector<8xf32> to vector<8x1xf32>
    %77 = vector.broadcast %76 : vector<8x1xf32> to vector<8x8xf32>
    %78 = arith.subf %74, %77 : vector<8x8xf32>
    %79 = math.exp %78 : vector<8x8xf32>
    %cst_30 = arith.constant dense<0.000000e+00> : vector<8xf32>
    %80 = vector.multi_reduction <add>, %79, %cst_30 [1] : vector<8x8xf32> to vector<8xf32>
    %81 = vector.shape_cast %80 : vector<8xf32> to vector<8x1xf32>
    %82 = vector.broadcast %81 : vector<8x1xf32> to vector<8x8xf32>
    %83 = arith.divf %79, %82 : vector<8x8xf32>
    %84 = arith.truncf %83 : vector<8x8xf32> to vector<8x8xbf16>
    %cst_31 = arith.constant dense<0.000000e+00> : vector<8x32xf32>
    %85 = tpu.matmul %84, %73, %cst_31 {dimension_numbers = #tpu.dot_dimension_numbers<[1], [0], [0], [1], [0, 0, 1, 1], [], []>} : vector<8x8xbf16>, vector<8x32xbf16>, vector<8x32xf32> -> vector<8x32xf32>
    %86 = arith.truncf %85 : vector<8x32xf32> to vector<8x32xbf16>
    %c0_32 = arith.constant 0 : index
    %c96 = arith.constant 96 : index
    %87 = vector.load %arg11[%c0_32, %c96] : memref<8x128xbf16, #tpu.memory_space<vmem>>, vector<8x32xbf16>
    tpu.vector_store %arg11[%c0_32, %c96], %86 {strides = array<i32>} : memref<8x128xbf16, #tpu.memory_space<vmem>>, vector<8x32xbf16>,
    %c0_33 = arith.constant 0 : index
    %c0_34 = arith.constant 0 : index
    %88 = vector.load %arg11[%c0_33, %c0_34] : memref<8x128xbf16, #tpu.memory_space<vmem>>, vector<8x128xbf16>
    %c0_35 = arith.constant 0 : index
    %c0_36 = arith.constant 0 : index
    %89 = vector.load %arg6[%c0_35, %c0_36] : memref<128x128xbf16, #tpu.memory_space<vmem>>, vector<128x128xbf16>
    %cst_37 = arith.constant dense<0.000000e+00> : vector<8x128xf32>
    %90 = tpu.matmul %88, %89, %cst_37 {dimension_numbers = #tpu.dot_dimension_numbers<[1], [0], [0], [1], [0, 0, 1, 1], [], []>} : vector<8x128xbf16>, vector<128x128xbf16>, vector<8x128xf32> -> vector<8x128xf32>
    %c0_38 = arith.constant 0 : index
    %c0_39 = arith.constant 0 : index
    %91 = vector.load %arg7[%c0_38, %c0_39] : memref<1x128xf32, #tpu.memory_space<vmem>>, vector<1x128xf32>
    %92 = vector.broadcast %91 : vector<1x128xf32> to vector<8x128xf32>
    %93 = arith.addf %90, %92 : vector<8x128xf32>
    %94 = arith.addf %1, %93 : vector<8x128xf32>
    %cst_40 = arith.constant dense<0.000000e+00> : vector<8xf32>
    %95 = vector.multi_reduction <add>, %94, %cst_40 [1] : vector<8x128xf32> to vector<8xf32>
    %96 = vector.shape_cast %95 : vector<8xf32> to vector<8x1xf32>
    %cst_41 = arith.constant 1.280000e+02 : f32
    %97 = vector.broadcast %cst_41 : f32 to vector<8x1xf32>
    %98 = arith.divf %96, %97 : vector<8x1xf32>
    %99 = vector.broadcast %98 : vector<8x1xf32> to vector<8x128xf32>
    %100 = arith.subf %94, %99 : vector<8x128xf32>
    %101 = arith.mulf %100, %100 : vector<8x128xf32>
    %cst_42 = arith.constant dense<0.000000e+00> : vector<8xf32>
    %102 = vector.multi_reduction <add>, %101, %cst_42 [1] : vector<8x128xf32> to vector<8xf32>
    %103 = vector.shape_cast %102 : vector<8xf32> to vector<8x1xf32>
    %cst_43 = arith.constant 1.280000e+02 : f32
    %104 = vector.broadcast %cst_43 : f32 to vector<8x1xf32>
    %105 = arith.divf %103, %104 : vector<8x1xf32>
    %106 = vector.broadcast %98 : vector<8x1xf32> to vector<8x128xf32>
    %107 = arith.subf %94, %106 : vector<8x128xf32>
    %cst_44 = arith.constant 9.99999974E-6 : f32
    %108 = vector.broadcast %cst_44 : f32 to vector<8x1xf32>
    %109 = arith.addf %105, %108 : vector<8x1xf32>
    %110 = math.rsqrt %109 : vector<8x1xf32>
    %111 = vector.broadcast %110 : vector<8x1xf32> to vector<8x128xf32>
    %112 = arith.mulf %107, %111 : vector<8x128xf32>
    %c0_45 = arith.constant 0 : index
    %c0_46 = arith.constant 0 : index
    %113 = vector.load %arg8[%c0_45, %c0_46] : memref<1x128xf32, #tpu.memory_space<vmem>>, vector<1x128xf32>
    %114 = vector.broadcast %113 : vector<1x128xf32> to vector<8x128xf32>
    %115 = arith.mulf %112, %114 : vector<8x128xf32>
    %c0_47 = arith.constant 0 : index
    %c0_48 = arith.constant 0 : index
    %116 = vector.load %arg9[%c0_47, %c0_48] : memref<1x128xf32, #tpu.memory_space<vmem>>, vector<1x128xf32>
    %117 = vector.broadcast %116 : vector<1x128xf32> to vector<8x128xf32>
    %118 = arith.addf %115, %117 : vector<8x128xf32>
    %c0_49 = arith.constant 0 : index
    %c0_50 = arith.constant 0 : index
    %c0_51 = arith.constant 0 : index
    %119 = vector.load %arg10[%c0_49, %c0_50, %c0_51] : memref<1x8x128xf32, #tpu.memory_space<vmem>>, vector<1x8x128xf32>
    %120 = vector.shape_cast %119 : vector<1x8x128xf32> to vector<8x128xf32>
    %121 = vector.shape_cast %118 : vector<8x128xf32> to vector<1x8x128xf32>
    tpu.vector_store %arg10[%c0_49, %c0_50, %c0_51], %121 {strides = array<i32>} : memref<1x8x128xf32, #tpu.memory_space<vmem>>, vector<1x8x128xf32>,
    return
  }
  func.func @transform_0(%arg0: i32) -> (i32, i32, i32) {
    %c0_i32 = arith.constant 0 : i32
    %c0_i32_0 = arith.constant 0 : i32
    %c0_i32_1 = arith.constant 0 : i32
    return %arg0, %c0_i32, %c0_i32_0 : i32, i32, i32
  }
  func.func @transform_1(%arg0: i32) -> (i32, i32) {
    %c0_i32 = arith.constant 0 : i32
    %c0_i32_0 = arith.constant 0 : i32
    %c0_i32_1 = arith.constant 0 : i32
    return %c0_i32, %c0_i32_0 : i32, i32
  }
  func.func @transform_2(%arg0: i32) -> (i32, i32) {
    %c0_i32 = arith.constant 0 : i32
    %c0_i32_0 = arith.constant 0 : i32
    %c0_i32_1 = arith.constant 0 : i32
    return %c0_i32, %c0_i32_0 : i32, i32
  }
  func.func @transform_3(%arg0: i32) -> (i32, i32) {
    %c0_i32 = arith.constant 0 : i32
    %c0_i32_0 = arith.constant 0 : i32
    %c0_i32_1 = arith.constant 0 : i32
    return %c0_i32, %c0_i32_0 : i32, i32
  }
  func.func @transform_4(%arg0: i32) -> (i32, i32) {
    %c0_i32 = arith.constant 0 : i32
    %c0_i32_0 = arith.constant 0 : i32
    %c0_i32_1 = arith.constant 0 : i32
    return %c0_i32, %c0_i32_0 : i32, i32
  }
  func.func @transform_5(%arg0: i32) -> (i32, i32) {
    %c0_i32 = arith.constant 0 : i32
    %c0_i32_0 = arith.constant 0 : i32
    %c0_i32_1 = arith.constant 0 : i32
    return %c0_i32, %c0_i32_0 : i32, i32
  }
  func.func @transform_6(%arg0: i32) -> (i32, i32) {
    %c0_i32 = arith.constant 0 : i32
    %c0_i32_0 = arith.constant 0 : i32
    %c0_i32_1 = arith.constant 0 : i32
    return %c0_i32, %c0_i32_0 : i32, i32
  }
  func.func @transform_7(%arg0: i32) -> (i32, i32) {
    %c0_i32 = arith.constant 0 : i32
    %c0_i32_0 = arith.constant 0 : i32
    %c0_i32_1 = arith.constant 0 : i32
    return %c0_i32, %c0_i32_0 : i32, i32
  }
  func.func @transform_8(%arg0: i32) -> (i32, i32) {
    %c0_i32 = arith.constant 0 : i32
    %c0_i32_0 = arith.constant 0 : i32
    %c0_i32_1 = arith.constant 0 : i32
    return %c0_i32, %c0_i32_0 : i32, i32
  }
  func.func @transform_9(%arg0: i32) -> (i32, i32, i32) {
    %c0_i32 = arith.constant 0 : i32
    %c0_i32_0 = arith.constant 0 : i32
    %c0_i32_1 = arith.constant 0 : i32
    return %arg0, %c0_i32, %c0_i32_0 : i32, i32, i32
  }
}

</mosaic_0001>

<llo_original>
// kernel: tpu_custom_call.1
$region0: #{tpu_custom_call.1}
  #allocation0 [shape = 'u32[]', space=smem, size = 0x4, offset = 0x4, fixed_abs, tag = 'smem constant byte address 0x4 - core index']
  #allocation1 [shape = 'u32[72,128]{1,0:T(1,128)}', space=vmem, size = 0x9000, scoped, tag = 'internal scratch']
  #allocation2 [shape = 'bf16[8,128]{1,0:T(8,128)(2,1)}', space=vmem, size = 0x800, scoped, tag = 'scratch operand']
  %s0 = inlined_call_operand.hbm [shape: f32[2,8,128], index: 0, kind: input, shape index: {}]
  %s1 = inlined_call_operand.hbm [shape: bf16[128,128], index: 1, kind: input, shape index: {}]
  %s2 = inlined_call_operand.hbm [shape: bf16[128,256], index: 2, kind: input, shape index: {}]
  %s3 = inlined_call_operand.vmem [shape: f32[1,128], index: 3, kind: input, shape index: {}]
  %s4 = inlined_call_operand.vmem [shape: f32[1,256], index: 4, kind: input, shape index: {}]
  %s5 = inlined_call_operand.hbm [shape: bf16[128,128], index: 5, kind: input, shape index: {}]
  %s6 = inlined_call_operand.vmem [shape: f32[1,128], index: 6, kind: input, shape index: {}]
  %s7 = inlined_call_operand.vmem [shape: f32[1,128], index: 7, kind: input, shape index: {}]
  %s8 = inlined_call_operand.vmem [shape: f32[1,128], index: 8, kind: input, shape index: {}]
  %s9 = inlined_call_operand.hbm [shape: f32[2,8,128], index: 9, kind: output, shape index: {}]
  %s10 = sld [smem:[#allocation0]]
  $region85: #{tpu_custom_call.1} parent=0
    _
  %s12 = ssub.s32 1, %s10
  %s13 = scalar_select 0, %s12, %s10
  $region1: #{tpu_custom_call.1} parent=0
    #allocation3 [shape = 'u8[8192]{0}', space=vmem, size = 0x2000, scoped, tag = 'input window, operand 0']
    #allocation4 [shape = 's32[2]{0}', space=sflag, size = 0x8, scoped, tag = 'scoped memory for tpu_custom_call.1']
    #allocation5 [shape = 's32[2]{0}', space=sflag, size = 0x8, scoped, tag = 'scoped memory for tpu_custom_call.1']
    #allocation6 [shape = 'u8[32768]{0}', space=vmem, size = 0x8000, scoped, tag = 'input window, operand 1, single buffered']
    #allocation7 [shape = 's32[1]{0}', space=sflag, size = 0x4, scoped, tag = 'scoped memory for tpu_custom_call.1']
    #allocation8 [shape = 'u8[65536]{0}', space=vmem, size = 0x10000, scoped, tag = 'input window, operand 2, single buffered']
    #allocation9 [shape = 'u8[32768]{0}', space=vmem, size = 0x8000, scoped, tag = 'input window, operand 5, single buffered']
    #allocation10 [shape = 's32[1]{0}', space=sflag, size = 0x4, scoped, tag = 'scoped memory for tpu_custom_call.1']
    #allocation11 [shape = 'u8[8192]{0}', space=vmem, size = 0x2000, scoped, tag = 'output window, operand 0']
    %14 = vsyncpa [#allocation4], 0
    %s15 = scalar_lea.sflag [#allocation4], 1
    %16 = vsyncpa %s15, 0
    %17 = vsyncpa [#allocation7], 0
    %18 = vsyncpa [#allocation10], 0
    %19 = vsyncpa [#allocation5], 0
    %s20 = scalar_lea.sflag [#allocation5], 1
    %21 = vsyncpa %s20, 0
    loop: start=0, step=1, limit=4
    $region2: #{tpu_custom_call.1} parent=1 // loop_pre_header
      _
    $region3: #{tpu_custom_call.1} parent=1 // loop_header
      %s23 = sphi 0, %s27
      %p24 = scmp.ge.s32.totalorder %s23, 4
      %s33 = sphi 0, %s35
      %s36 = sphi 0, %s33
      %s37 = sphi 0, %s36
      %s53 = sphi 0, %s37
      %s57 = sphi 0, %s57
      %s59 = sphi 0, %s57
      %s60 = sphi 0, %s59
      %s74 = sphi 0, %s60
      %s78 = sphi 0, %s78
      %s80 = sphi 0, %s78
      %s81 = sphi 0, %s80
      %s95 = sphi 0, %s81
      %s99 = sphi 0, %s99
      %s101 = sphi 0, %s99
      %s102 = sphi 0, %s101
      %s116 = sphi 0, %s102
      %s120 = sphi 0, %s120
      %s122 = sphi 0, %s120
      %s123 = sphi 0, %s122
      %s137 = sphi 0, %s123
      %s141 = sphi 0, %s141
      %s143 = sphi 0, %s141
      %s144 = sphi 0, %s143
      %s158 = sphi 0, %s144
      %s162 = sphi 0, %s162
      %s164 = sphi 0, %s162
      %s165 = sphi 0, %s164
      %s179 = sphi 0, %s165
      %s183 = sphi 0, %s183
      %s185 = sphi 0, %s183
      %s186 = sphi 0, %s185
      %s200 = sphi 0, %s186
      %s204 = sphi 0, %s204
      %s206 = sphi 0, %s204
      %s207 = sphi 0, %s206
      %s221 = sphi 0, %s207
      %s227 = sphi 0, %s229
      %s230 = sphi 0, %s227
      %s231 = sphi 0, %s230
      %s247 = sphi 0, %s231
    $region4: #{tpu_custom_call.1} parent=1 // loop_header_branch
      %26 = sbr.rel (%p24) target = $region8
    $region5: #{tpu_custom_call.1} parent=1 // loop_body
      %s28 = ssub.s32 %s23, 1
      %s29 = ssub.s32 %s23, 2
      %s30 = sadd.s32 %s23, 1
      %s31 = ssub.s32 %s23, %s30
      %p32 = scmp.eq.s32.totalorder %s31, 0
      %s34 = sadd.s32 %s33, 1
      %s35 = scalar_select %p32, %s33, %s34
      %p38 = pneg %p32
      %p39 = scmp.eq.s32.totalorder %s23, 1
      %p40 = por %p38, %p39
      %p41 = scmp.ne.s32.totalorder %s33, %s36
      %p42 = scmp.eq.s32.totalorder %s23, 0
      %p43 = por %p41, %p42
      %p44 = scmp.ne.s32.totalorder %s33, %s36
      %p45 = scmp.eq.s32.totalorder %s28, 1
      %p46 = por %p44, %p45
      %p47 = scmp.ne.s32.totalorder %s36, %s37
      %p48 = scmp.eq.s32.totalorder %s28, 0
      %p49 = por %p47, %p48
      %p50 = scmp.ne.s32.totalorder %s36, %s37
      %p51 = scmp.eq.s32.totalorder %s29, 1
      %p52 = por %p50, %p51
      %p54 = scmp.ne.s32.totalorder %s37, %s53
      %p55 = scmp.eq.s32.totalorder %s29, 0
      %p56 = por %p54, %p55
      %s58 = sadd.s32 %s57, 1
      %p61 = scmp.eq.s32.totalorder %s23, 1
      %p62 = scmp.ne.s32.totalorder %s57, %s59
      %p63 = scmp.eq.s32.totalorder %s23, 0
      %p64 = por %p62, %p63
      %p65 = scmp.ne.s32.totalorder %s57, %s59
      %p66 = scmp.eq.s32.totalorder %s28, 1
      %p67 = por %p65, %p66
      %p68 = scmp.ne.s32.totalorder %s59, %s60
      %p69 = scmp.eq.s32.totalorder %s28, 0
      %p70 = por %p68, %p69
      %p71 = scmp.ne.s32.totalorder %s59, %s60
      %p72 = scmp.eq.s32.totalorder %s29, 1
      %p73 = por %p71, %p72
      %p75 = scmp.ne.s32.totalorder %s60, %s74
      %p76 = scmp.eq.s32.totalorder %s29, 0
      %p77 = por %p75, %p76
      %s79 = sadd.s32 %s78, 1
      %p82 = scmp.eq.s32.totalorder %s23, 1
      %p83 = scmp.ne.s32.totalorder %s78, %s80
      %p84 = scmp.eq.s32.totalorder %s23, 0
      %p85 = por %p83, %p84
      %p86 = scmp.ne.s32.totalorder %s78, %s80
      %p87 = scmp.eq.s32.totalorder %s28, 1
      %p88 = por %p86, %p87
      %p89 = scmp.ne.s32.totalorder %s80, %s81
      %p90 = scmp.eq.s32.totalorder %s28, 0
      %p91 = por %p89, %p90
      %p92 = scmp.ne.s32.totalorder %s80, %s81
      %p93 = scmp.eq.s32.totalorder %s29, 1
      %p94 = por %p92, %p93
      %p96 = scmp.ne.s32.totalorder %s81, %s95
      %p97 = scmp.eq.s32.totalorder %s29, 0
      %p98 = por %p96, %p97
      %s100 = sadd.s32 %s99, 1
      %p103 = scmp.eq.s32.totalorder %s23, 1
      %p104 = scmp.ne.s32.totalorder %s99, %s101
      %p105 = scmp.eq.s32.totalorder %s23, 0
      %p106 = por %p104, %p105
      %p107 = scmp.ne.s32.totalorder %s99, %s101
      %p108 = scmp.eq.s32.totalorder %s28, 1
      %p109 = por %p107, %p108
      %p110 = scmp.ne.s32.totalorder %s101, %s102
      %p111 = scmp.eq.s32.totalorder %s28, 0
      %p112 = por %p110, %p111
      %p113 = scmp.ne.s32.totalorder %s101, %s102
      %p114 = scmp.eq.s32.totalorder %s29, 1
      %p115 = por %p113, %p114
      %p117 = scmp.ne.s32.totalorder %s102, %s116
      %p118 = scmp.eq.s32.totalorder %s29, 0
      %p119 = por %p117, %p118
      %s121 = sadd.s32 %s120, 1
      %p124 = scmp.eq.s32.totalorder %s23, 1
      %p125 = scmp.ne.s32.totalorder %s120, %s122
      %p126 = scmp.eq.s32.totalorder %s23, 0
      %p127 = por %p125, %p126
      %p128 = scmp.ne.s32.totalorder %s120, %s122
      %p129 = scmp.eq.s32.totalorder %s28, 1
      %p130 = por %p128, %p129
      %p131 = scmp.ne.s32.totalorder %s122, %s123
      %p132 = scmp.eq.s32.totalorder %s28, 0
      %p133 = por %p131, %p132
      %p134 = scmp.ne.s32.totalorder %s122, %s123
      %p135 = scmp.eq.s32.totalorder %s29, 1
      %p136 = por %p134, %p135
      %p138 = scmp.ne.s32.totalorder %s123, %s137
      %p139 = scmp.eq.s32.totalorder %s29, 0
      %p140 = por %p138, %p139
      %s142 = sadd.s32 %s141, 1
      %p145 = scmp.eq.s32.totalorder %s23, 1
      %p146 = scmp.ne.s32.totalorder %s141, %s143
      %p147 = scmp.eq.s32.totalorder %s23, 0
      %p148 = por %p146, %p147
      %p149 = scmp.ne.s32.totalorder %s141, %s143
      %p150 = scmp.eq.s32.totalorder %s28, 1
      %p151 = por %p149, %p150
      %p152 = scmp.ne.s32.totalorder %s143, %s144
      %p153 = scmp.eq.s32.totalorder %s28, 0
      %p154 = por %p152, %p153
      %p155 = scmp.ne.s32.totalorder %s143, %s144
      %p156 = scmp.eq.s32.totalorder %s29, 1
      %p157 = por %p155, %p156
      %p159 = scmp.ne.s32.totalorder %s144, %s158
      %p160 = scmp.eq.s32.totalorder %s29, 0
      %p161 = por %p159, %p160
      %s163 = sadd.s32 %s162, 1
      %p166 = scmp.eq.s32.totalorder %s23, 1
      %p167 = scmp.ne.s32.totalorder %s162, %s164
      %p168 = scmp.eq.s32.totalorder %s23, 0
      %p169 = por %p167, %p168
      %p170 = scmp.ne.s32.totalorder %s162, %s164
      %p171 = scmp.eq.s32.totalorder %s28, 1
      %p172 = por %p170, %p171
      %p173 = scmp.ne.s32.totalorder %s164, %s165
      %p174 = scmp.eq.s32.totalorder %s28, 0
      %p175 = por %p173, %p174
      %p176 = scmp.ne.s32.totalorder %s164, %s165
      %p177 = scmp.eq.s32.totalorder %s29, 1
      %p178 = por %p176, %p177
      %p180 = scmp.ne.s32.totalorder %s165, %s179
      %p181 = scmp.eq.s32.totalorder %s29, 0
      %p182 = por %p180, %p181
      %s184 = sadd.s32 %s183, 1
      %p187 = scmp.eq.s32.totalorder %s23, 1
      %p188 = scmp.ne.s32.totalorder %s183, %s185
      %p189 = scmp.eq.s32.totalorder %s23, 0
      %p190 = por %p188, %p189
      %p191 = scmp.ne.s32.totalorder %s183, %s185
      %p192 = scmp.eq.s32.totalorder %s28, 1
      %p193 = por %p191, %p192
      %p194 = scmp.ne.s32.totalorder %s185, %s186
      %p195 = scmp.eq.s32.totalorder %s28, 0
      %p196 = por %p194, %p195
      %p197 = scmp.ne.s32.totalorder %s185, %s186
      %p198 = scmp.eq.s32.totalorder %s29, 1
      %p199 = por %p197, %p198
      %p201 = scmp.ne.s32.totalorder %s186, %s200
      %p202 = scmp.eq.s32.totalorder %s29, 0
      %p203 = por %p201, %p202
      %s205 = sadd.s32 %s204, 1
      %p208 = scmp.eq.s32.totalorder %s23, 1
      %p209 = scmp.ne.s32.totalorder %s204, %s206
      %p210 = scmp.eq.s32.totalorder %s23, 0
      %p211 = por %p209, %p210
      %p212 = scmp.ne.s32.totalorder %s204, %s206
      %p213 = scmp.eq.s32.totalorder %s28, 1
      %p214 = por %p212, %p213
      %p215 = scmp.ne.s32.totalorder %s206, %s207
      %p216 = scmp.eq.s32.totalorder %s28, 0
      %p217 = por %p215, %p216
      %p218 = scmp.ne.s32.totalorder %s206, %s207
      %p219 = scmp.eq.s32.totalorder %s29, 1
      %p220 = por %p218, %p219
      %p222 = scmp.ne.s32.totalorder %s207, %s221
      %p223 = scmp.eq.s32.totalorder %s29, 0
      %p224 = por %p222, %p223
      %s225 = ssub.s32 %s23, %s30
      %p226 = scmp.eq.s32.totalorder %s225, 0
      %s228 = sadd.s32 %s227, 1
      %s229 = scalar_select %p226, %s227, %s228
      %p232 = pneg %p226
      %p233 = scmp.eq.s32.totalorder %s23, 1
      %p234 = por %p232, %p233
      %p235 = scmp.ne.s32.totalorder %s227, %s230
      %p236 = scmp.eq.s32.totalorder %s23, 0
      %p237 = por %p235, %p236
      %p238 = scmp.ne.s32.totalorder %s227, %s230
      %p239 = scmp.eq.s32.totalorder %s28, 1
      %p240 = por %p238, %p239
      %p241 = scmp.ne.s32.totalorder %s230, %s231
      %p242 = scmp.eq.s32.totalorder %s28, 0
      %p243 = por %p241, %p242
      %p244 = scmp.ne.s32.totalorder %s230, %s231
      %p245 = scmp.eq.s32.totalorder %s29, 1
      %p246 = por %p244, %p245
      %p248 = scmp.ne.s32.totalorder %s231, %s247
      %p249 = scmp.eq.s32.totalorder %s29, 0
      %p250 = por %p248, %p249
      %p251 = scmp.le.s32.totalorder 1, %s23
      %p252 = scmp.lt.s32.totalorder %s23, 3
      %p253 = pnand %p251, %p252
      %p254 = pneg %p253
      // Predicated region
      $region9: #{tpu_custom_call.1} parent=5 // pred_check
        _
      $region10: #{tpu_custom_call.1} parent=5 // pred_check_branch
        %256 = sbr.rel (%p253) target = $region12
      $region11: #{tpu_custom_call.1} parent=5 // pred_region
        %s257 = ssub.s32 %s23, 1
        // Predicated region
        $region13: #{tpu_custom_call.1} parent=11 // pred_check
          %p258 = pneg %p70
        $region14: #{tpu_custom_call.1} parent=11 // pred_check_branch
          %260 = sbr.rel (%p258) target = $region16
        $region15: #{tpu_custom_call.1} parent=11 // pred_region
          %262 = vsyncadd [#allocation7], 0
          %s263 = sshll.u32 %s1, 4
          %s264 = int_to_ptr.hbm [resolvable:$true] %s263
          %s265 = sshll.u32 [#allocation6], 4
          %s266 = int_to_ptr.vmem [resolvable:$true] %s265
          %271 = dma.hbm_to_vmem [thread:$0]  %s264, 1024, %s266, [#allocation7], 64, 64, 4
        $region16: #{tpu_custom_call.1} parent=11 // pred_fallthru
          _
        // Predicated region
        $region17: #{tpu_custom_call.1} parent=11 // pred_check
          %p272 = pneg %p91
        $region18: #{tpu_custom_call.1} parent=11 // pred_check_branch
          %274 = sbr.rel (%p272) target = $region20
        $region19: #{tpu_custom_call.1} parent=11 // pred_region
          %276 = vsyncadd [#allocation7], 0
          %s277 = sshll.u32 %s2, 4
          %s278 = int_to_ptr.hbm [resolvable:$true] %s277
          %s279 = sshll.u32 [#allocation8], 4
          %s280 = int_to_ptr.vmem [resolvable:$true] %s279
          %285 = dma.hbm_to_vmem [thread:$0]  %s278, 2048, %s280, [#allocation7], 128, 128, 8
        $region20: #{tpu_custom_call.1} parent=11 // pred_fallthru
          _
        // Predicated region
        $region21: #{tpu_custom_call.1} parent=11 // pred_check
          %p286 = pneg %p112
        $region22: #{tpu_custom_call.1} parent=11 // pred_check_branch
          %288 = sbr.rel (%p286) target = $region24
        $region23: #{tpu_custom_call.1} parent=11 // pred_region
          _
        $region24: #{tpu_custom_call.1} parent=11 // pred_fallthru
          _
        // Predicated region
        $region25: #{tpu_custom_call.1} parent=11 // pred_check
          %p289 = pneg %p133
        $region26: #{tpu_custom_call.1} parent=11 // pred_check_branch
          %291 = sbr.rel (%p289) target = $region28
        $region27: #{tpu_custom_call.1} parent=11 // pred_region
          _
        $region28: #{tpu_custom_call.1} parent=11 // pred_fallthru
          _
        // Predicated region
        $region29: #{tpu_custom_call.1} parent=11 // pred_check
          %p292 = pneg %p154
        $region30: #{tpu_custom_call.1} parent=11 // pred_check_branch
          %294 = sbr.rel (%p292) target = $region32
        $region31: #{tpu_custom_call.1} parent=11 // pred_region
          %296 = vsyncadd [#allocation10], 0
          %s297 = sshll.u32 %s5, 4
          %s298 = int_to_ptr.hbm [resolvable:$true] %s297
          %s299 = sshll.u32 [#allocation9], 4
          %s300 = int_to_ptr.vmem [resolvable:$true] %s299
          %305 = dma.hbm_to_vmem [thread:$0]  %s298, 1024, %s300, [#allocation10], 64, 64, 4
        $region32: #{tpu_custom_call.1} parent=11 // pred_fallthru
          _
        // Predicated region
        $region33: #{tpu_custom_call.1} parent=11 // pred_check
          %p306 = pneg %p175
        $region34: #{tpu_custom_call.1} parent=11 // pred_check_branch
          %308 = sbr.rel (%p306) target = $region36
        $region35: #{tpu_custom_call.1} parent=11 // pred_region
          _
        $region36: #{tpu_custom_call.1} parent=11 // pred_fallthru
          _
        // Predicated region
        $region37: #{tpu_custom_call.1} parent=11 // pred_check
          %p309 = pneg %p196
        $region38: #{tpu_custom_call.1} parent=11 // pred_check_branch
          %311 = sbr.rel (%p309) target = $region40
        $region39: #{tpu_custom_call.1} parent=11 // pred_region
          _
        $region40: #{tpu_custom_call.1} parent=11 // pred_fallthru
          _
        // Predicated region
        $region41: #{tpu_custom_call.1} parent=11 // pred_check
          %p312 = pneg %p217
        $region42: #{tpu_custom_call.1} parent=11 // pred_check_branch
          %314 = sbr.rel (%p312) target = $region44
        $region43: #{tpu_custom_call.1} parent=11 // pred_region
          _
        $region44: #{tpu_custom_call.1} parent=11 // pred_fallthru
          _
      $region12: #{tpu_custom_call.1} parent=5 // pred_fallthru
        _
      %p315 = scmp.lt.s32.totalorder %s23, 2
      // Predicated region
      $region45: #{tpu_custom_call.1} parent=5 // pred_check
        %p316 = pneg %p315
      $region46: #{tpu_custom_call.1} parent=5 // pred_check_branch
        %318 = sbr.rel (%p316) target = $region48
      $region47: #{tpu_custom_call.1} parent=5 // pred_region
        // Predicated region
        $region49: #{tpu_custom_call.1} parent=47 // pred_check
          %p319 = pneg %p43
        $region50: #{tpu_custom_call.1} parent=47 // pred_check_branch
          %321 = sbr.rel (%p319) target = $region52
        $region51: #{tpu_custom_call.1} parent=47 // pred_region
          %s322 = sand.u32 %s33, 1
          %s323 = scalar_lea.sflag [#allocation4], %s322
          %s324 = sand.u32 %s33, 1
          %s325 = smul.addr %s324, 8
          %s326 = scalar_lea.vmem [#allocation3], %s325
          %328 = vsyncadd %s323, 0
          %s329 = smul.addr %s23, 8
          %s330 = scalar_lea.hbm %s0, %s329
          %s332 = sshll.u32 %s330, 4
          %s333 = int_to_ptr.hbm [resolvable:$true] %s332
          %s334 = sshll.u32 %s326, 4
          %s335 = int_to_ptr.vmem [resolvable:$true] %s334
          %337 = dma.hbm_to_vmem [thread:$0]  %s333, 128, %s335, %s323
        $region52: #{tpu_custom_call.1} parent=47 // pred_fallthru
          _
      $region48: #{tpu_custom_call.1} parent=5 // pred_fallthru
        _
      %p338 = scmp.le.s32.totalorder 1, %s23
      %p339 = scmp.lt.s32.totalorder %s23, 3
      %p340 = pnand %p338, %p339
      %p341 = pneg %p340
      // Predicated region
      $region53: #{tpu_custom_call.1} parent=5 // pred_check
        _
      $region54: #{tpu_custom_call.1} parent=5 // pred_check_branch
        %343 = sbr.rel (%p340) target = $region56
      $region55: #{tpu_custom_call.1} parent=5 // pred_region
        %s344 = ssub.s32 %s23, 1
        %s345 = sand.u32 %s36, 1
        %s346 = scalar_lea.sflag [#allocation4], %s345
        %s347 = sand.u32 %s36, 1
        %s348 = smul.addr %s347, 8
        %s349 = scalar_lea.vmem [#allocation3], %s348
        // Predicated region
        $region57: #{tpu_custom_call.1} parent=55 // pred_check
          %p350 = pneg %p49
        $region58: #{tpu_custom_call.1} parent=55 // pred_check_branch
          %352 = sbr.rel (%p350) target = $region60
        $region59: #{tpu_custom_call.1} parent=55 // pred_region
          %354 = dma.done %s346, 128
        $region60: #{tpu_custom_call.1} parent=55 // pred_fallthru
          _
        // Predicated region
        $region61: #{tpu_custom_call.1} parent=55 // pred_check
          %p355 = pneg %p70
        $region62: #{tpu_custom_call.1} parent=55 // pred_check_branch
          %357 = sbr.rel (%p355) target = $region64
        $region63: #{tpu_custom_call.1} parent=55 // pred_region
          %359 = dma.done [#allocation7], 1024
        $region64: #{tpu_custom_call.1} parent=55 // pred_fallthru
          _
        // Predicated region
        $region65: #{tpu_custom_call.1} parent=55 // pred_check
          %p360 = pneg %p91
        $region66: #{tpu_custom_call.1} parent=55 // pred_check_branch
          %362 = sbr.rel (%p360) target = $region68
        $region67: #{tpu_custom_call.1} parent=55 // pred_region
          %364 = dma.done [#allocation7], 2048
        $region68: #{tpu_custom_call.1} parent=55 // pred_fallthru
          _
        // Predicated region
        $region69: #{tpu_custom_call.1} parent=55 // pred_check
          %p365 = pneg %p154
        $region70: #{tpu_custom_call.1} parent=55 // pred_check_branch
          %367 = sbr.rel (%p365) target = $region72
        $region71: #{tpu_custom_call.1} parent=55 // pred_region
          %369 = dma.done [#allocation10], 1024
        $region72: #{tpu_custom_call.1} parent=55 // pred_fallthru
          _
        %s370 = sand.u32 %s36, 1
        %s371 = scalar_lea.sflag [#allocation4], %s370
        %s372 = sand.u32 %s36, 1
        %s373 = smul.addr %s372, 8
        %s374 = scalar_lea.vmem [#allocation3], %s373
        %p375 = pneg %p49
        %p376 = pneg %p46
        %p377 = pneg %p70
        %p378 = pneg %p67
        %p379 = pneg %p91
        %p380 = pneg %p88
        %p381 = pneg %p112
        %p382 = pneg %p109
        %p383 = pneg %p133
        %p384 = pneg %p130
        %p385 = pneg %p154
        %p386 = pneg %p151
        %p387 = pneg %p175
        %p388 = pneg %p172
        %p389 = pneg %p196
        %p390 = pneg %p193
        %p391 = pneg %p217
        %p392 = pneg %p214
        %p393 = pneg %p243
        %p394 = pneg %p240
        %s395 = sand.u32 %s230, 1
        %s396 = scalar_lea.sflag [#allocation5], %s395
        %s397 = sand.u32 %s230, 1
        %s398 = smul.addr %s397, 8
        %s399 = scalar_lea.vmem [#allocation11], %s398
        %v401 = vld [vmem:[%s349] sm:$0xff]
        %v402 = vpack.c.bf16 %v401, %v401
        %v403 = vld [vmem:[#allocation6] sm:$0xf]
        %v404 = vld [vmem:[#allocation6 + $0x4] sm:$0xf]
        %v405 = vld [vmem:[#allocation6 + $0x8] sm:$0xf]
        %v406 = vld [vmem:[#allocation6 + $0xc] sm:$0xf]
        %v407 = vld [vmem:[#allocation6 + $0x10] sm:$0xf]
        %v408 = vld [vmem:[#allocation6 + $0x14] sm:$0xf]
        %v409 = vld [vmem:[#allocation6 + $0x18] sm:$0xf]
        %v410 = vld [vmem:[#allocation6 + $0x1c] sm:$0xf]
        %v411 = vld [vmem:[#allocation6 + $0x20] sm:$0xf]
        %v412 = vld [vmem:[#allocation6 + $0x24] sm:$0xf]
        %v413 = vld [vmem:[#allocation6 + $0x28] sm:$0xf]
        %v414 = vld [vmem:[#allocation6 + $0x2c] sm:$0xf]
        %v415 = vld [vmem:[#allocation6 + $0x30] sm:$0xf]
        %v416 = vld [vmem:[#allocation6 + $0x34] sm:$0xf]
        %v417 = vld [vmem:[#allocation6 + $0x38] sm:$0xf]
        %v418 = vld [vmem:[#allocation6 + $0x3c] sm:$0xf]
        %v419 = vld [vmem:[%s3] sm:$0x1]
        %v421 = vperm.slane %v419, 0
        %v439 = vunpack.c.l.b16 %v403
        %v440 = vunpack.c.l.b16 %v404
        %v441 = vunpack.c.l.b16 %v405
        %v442 = vunpack.c.l.b16 %v406
        %v443 = vunpack.c.l.b16 %v407
        %v444 = vunpack.c.l.b16 %v408
        %v445 = vunpack.c.l.b16 %v409
        %v446 = vunpack.c.l.b16 %v410
        %v447 = vunpack.c.l.b16 %v411
        %v448 = vunpack.c.l.b16 %v412
        %v449 = vunpack.c.l.b16 %v413
        %v450 = vunpack.c.l.b16 %v414
        %v451 = vunpack.c.l.b16 %v415
        %v452 = vunpack.c.l.b16 %v416
        %v453 = vunpack.c.l.b16 %v417
        %v454 = vunpack.c.l.b16 %v418
        %v455 = vpack.c.b16 %v440, %v439
        %v456 = vpack.c.b16 %v442, %v441
        %v457 = vpack.c.b16 %v444, %v443
        %v458 = vpack.c.b16 %v446, %v445
        %v459 = vpack.c.b16 %v448, %v447
        %v460 = vpack.c.b16 %v450, %v449
        %v461 = vpack.c.b16 %v452, %v451
        %v462 = vpack.c.b16 %v454, %v453
        %471 = vmatpush.bf16.msra.mxu0 %v462
        %472 = vmatpush.bf16.msra.mxu0 %v461
        %473 = vmatpush.bf16.msra.mxu0 %v460
        %474 = vmatpush.bf16.msra.mxu0 %v459
        %475 = vmatpush.bf16.msra.mxu0 %v458
        %476 = vmatpush.bf16.msra.mxu0 %v457
        %477 = vmatpush.bf16.msra.mxu0 %v456
        %478 = vmatpush.bf16.msra.mxu0 %v455
        %479 = vmatmul.bf16.gmra.mxu0 %v402
        %v480 = vpop.f32.mrf.mxu0
        %v481 = vadd.f32 %v421, %v480
        %v482 = vpop.f32.mrf.mxu0
        %483 = vdwg.mxu0
        %v484 = vld [vmem:[#allocation8] sm:$0xff]
        %v485 = vld [vmem:[#allocation8 + $0x8] sm:$0xff]
        %v486 = vld [vmem:[#allocation8 + $0x10] sm:$0xff]
        %v487 = vld [vmem:[#allocation8 + $0x18] sm:$0xff]
        %v488 = vld [vmem:[#allocation8 + $0x20] sm:$0xff]
        %v489 = vld [vmem:[#allocation8 + $0x28] sm:$0xff]
        %v490 = vld [vmem:[#allocation8 + $0x30] sm:$0xff]
        %v491 = vld [vmem:[#allocation8 + $0x38] sm:$0xff]
        %v492 = vld [vmem:[#allocation8 + $0x40] sm:$0xff]
        %v493 = vld [vmem:[#allocation8 + $0x48] sm:$0xff]
        %v494 = vld [vmem:[#allocation8 + $0x50] sm:$0xff]
        %v495 = vld [vmem:[#allocation8 + $0x58] sm:$0xff]
        %v496 = vld [vmem:[#allocation8 + $0x60] sm:$0xff]
        %v497 = vld [vmem:[#allocation8 + $0x68] sm:$0xff]
        %v498 = vld [vmem:[#allocation8 + $0x70] sm:$0xff]
        %v499 = vld [vmem:[#allocation8 + $0x78] sm:$0xff]
        %v500 = vld [vmem:[%s4] sm:$0x3]
        %v502 = vperm.slane %v500, 0
        %v503 = vperm.slane %v500, 1
        %v522 = vunpack.c.l.b16 %v484
        %v523 = vunpack.c.h.b16 %v484
        %v524 = vunpack.c.l.b16 %v485
        %v525 = vunpack.c.h.b16 %v485
        %v526 = vunpack.c.l.b16 %v486
        %v527 = vunpack.c.h.b16 %v486
        %v528 = vunpack.c.l.b16 %v487
        %v529 = vunpack.c.h.b16 %v487
        %v530 = vunpack.c.l.b16 %v488
        %v531 = vunpack.c.h.b16 %v488
        %v532 = vunpack.c.l.b16 %v489
        %v533 = vunpack.c.h.b16 %v489
        %v534 = vunpack.c.l.b16 %v490
        %v535 = vunpack.c.h.b16 %v490
        %v536 = vunpack.c.l.b16 %v491
        %v537 = vunpack.c.h.b16 %v491
        %v538 = vunpack.c.l.b16 %v492
        %v539 = vunpack.c.h.b16 %v492
        %v540 = vunpack.c.l.b16 %v493
        %v541 = vunpack.c.h.b16 %v493
        %v542 = vunpack.c.l.b16 %v494
        %v543 = vunpack.c.h.b16 %v494
        %v544 = vunpack.c.l.b16 %v495
        %v545 = vunpack.c.h.b16 %v495
        %v546 = vunpack.c.l.b16 %v496
        %v547 = vunpack.c.h.b16 %v496
        %v548 = vunpack.c.l.b16 %v497
        %v549 = vunpack.c.h.b16 %v497
        %v550 = vunpack.c.l.b16 %v498
        %v551 = vunpack.c.h.b16 %v498
        %v552 = vunpack.c.l.b16 %v499
        %v553 = vunpack.c.h.b16 %v499
        %v554 = vpack.c.b16 %v524, %v522
        %v555 = vpack.c.b16 %v525, %v523
        %v556 = vpack.c.b16 %v528, %v526
        %v557 = vpack.c.b16 %v529, %v527
        %v558 = vpack.c.b16 %v532, %v530
        %v559 = vpack.c.b16 %v533, %v531
        %v560 = vpack.c.b16 %v536, %v534
        %v561 = vpack.c.b16 %v537, %v535
        %v562 = vpack.c.b16 %v540, %v538
        %v563 = vpack.c.b16 %v541, %v539
        %v564 = vpack.c.b16 %v544, %v542
        %v565 = vpack.c.b16 %v545, %v543
        %v566 = vpack.c.b16 %v548, %v546
        %v567 = vpack.c.b16 %v549, %v547
        %v568 = vpack.c.b16 %v552, %v550
        %v569 = vpack.c.b16 %v553, %v551
        %586 = vmatpush.bf16.msra.mxu0 %v568
        %587 = vmatpush.bf16.msra.mxu0 %v566
        %588 = vmatpush.bf16.msra.mxu0 %v564
        %589 = vmatpush.bf16.msra.mxu0 %v562
        %590 = vmatpush.bf16.msra.mxu0 %v560
        %591 = vmatpush.bf16.msra.mxu0 %v558
        %592 = vmatpush.bf16.msra.mxu0 %v556
        %593 = vmatpush.bf16.msra.mxu0 %v554
        %594 = vmatmul.bf16.gmra.mxu0 %v402
        %v595 = vpop.f32.mrf.mxu0
        %v596 = vadd.f32 %v502, %v595
        %v597 = vpop.f32.mrf.mxu0
        %598 = vdwg.mxu0
        %599 = vmatpush.bf16.msra.mxu0 %v569
        %600 = vmatpush.bf16.msra.mxu0 %v567
        %601 = vmatpush.bf16.msra.mxu0 %v565
        %602 = vmatpush.bf16.msra.mxu0 %v563
        %603 = vmatpush.bf16.msra.mxu0 %v561
        %604 = vmatpush.bf16.msra.mxu0 %v559
        %605 = vmatpush.bf16.msra.mxu0 %v557
        %606 = vmatpush.bf16.msra.mxu0 %v555
        %607 = vmatmul.bf16.gmra.mxu0 %v402
        %v608 = vpop.f32.mrf.mxu0
        %v609 = vadd.f32 %v503, %v608
        %v610 = vpop.f32.mrf.mxu0
        %611 = vdwg.mxu0
        %v612 = vmul.f32 %v481, 0.17677669
        %v613 = vpack.c.bf16 %v612, %v612
        %v614 = vpack.c.bf16 %v596, %v596
        %v615 = vpack.c.bf16 %v609, %v609
        %vm616 = vcmask 261120
        %v618 = vsel %vm616, %v613, 0
        %v621 = vsel %vm616, %v614, 0
        %623 = vmatpush.bf16.xpose.msra.mxu0 0
        %624 = vmatpush.bf16.xpose.msra.mxu0 0
        %625 = vmatpush.bf16.xpose.msra.mxu0 0
        %626 = vmatpush.bf16.xpose.msra.mxu0 0
        %627 = vmatpush.bf16.xpose.msra.mxu0 0
        %628 = vmatpush.bf16.xpose.msra.mxu0 0
        %629 = vmatpush.bf16.xpose.msra.mxu0 0
        %630 = vmatpush.bf16.xpose.msra.mxu0 %v621
        %631 = vmatmul.bf16.gmra.mxu0 %v618
        %v632 = vpop.f32.mrf.mxu0
        %v633 = vadd.f32 0.0, %v632
        %v634 = vpop.f32.mrf.mxu0
        %635 = vdwg.mxu0
        %vm636 = vcmask 64512
        %v637 = vsel %vm636, %v633, -inf
        %638 = vmax.xlane.f32.xlu0 %v637
        %v639 = vpop.xlane.xlu0 %638
        %v640 = vsub.f32 %v633, %v639
        %v641 = vmul.f32 %v640, 1.442695
        %v642 = vpow.pop %v641
        %v643 = vsel %vm636, %v642, 0.0
        %644 = vadd.xlane.f32.xlu0 %v643
        %v645 = vpop.xlane.xlu0 %644
        %v646 = vrcp.pop %v645
        %v647 = vmul.f32 %v645, %v646
        %v648 = vsub.f32 1.0, %v647
        %v649 = vmul.f32 %v646, %v648
        %v650 = vadd.f32 %v646, %v649
        %vm651 = vweird.f32 %v645
        %vm652 = vweird.f32 %v646
        %vm653 = vmor %vm651, %vm652
        %v654 = vsel %vm653, %v646, %v650
        %v655 = vand.u32 2147483647, %v645
        %vm656 = vcmp.eq.f32.partialorder %v655, 8.507059e+37
        %v657 = vand.u32 %v645, 2147483648
        %v658 = vor.u32 1.1754944e-38, %v657
        %v659 = vsel %vm656, %v658, %v654
        %v660 = vmul.f32 %v642, %v659
        %v661 = vpack.c.bf16 %v660, %v660
        %v663 = vsel %vm636, %v661, 0
        %vm665 = vcmask 1043456
        %v667 = vsel %vm665, %v615, 0
        %669 = vmatpush.bf16.msra.mxu0 0
        %670 = vmatpush.bf16.msra.mxu0 0
        %671 = vmatpush.bf16.msra.mxu0 0
        %672 = vmatpush.bf16.msra.mxu0 0
        %673 = vmatpush.bf16.msra.mxu0 0
        %674 = vmatpush.bf16.msra.mxu0 0
        %675 = vmatpush.bf16.msra.mxu0 0
        %676 = vmatpush.bf16.msra.mxu0 %v667
        %677 = vmatmul.bf16.gmra.mxu0 %v663
        %v678 = vpop.f32.mrf.mxu0
        %v679 = vadd.f32 0.0, %v678
        %v680 = vpop.f32.mrf.mxu0
        %681 = vdwg.mxu0
        %v682 = vpack.c.bf16 %v679, %v679
        %vm683 = vcmask 257024
        %684 = vst.msk [vmem:[#allocation2] sm:$0xf] %vm683, %v682
        %v686 = vunpack.c.l.b16 %v613
        %v687 = vpack.c.b16 %v686, %v686
        %688 = vrot.lane.b32.xlu0 %v687, 96
        %v689 = vpop.permute.xlu0 %688
        %v691 = vunpack.c.l.b16 %v614
        %v692 = vpack.c.b16 %v691, %v691
        %693 = vrot.lane.b32.xlu0 %v692, 96
        %v694 = vpop.permute.xlu0 %693
        %v696 = vsel %vm616, %v689, 0
        %v699 = vsel %vm616, %v694, 0
        %701 = vmatpush.bf16.xpose.msra.mxu0 0
        %702 = vmatpush.bf16.xpose.msra.mxu0 0
        %703 = vmatpush.bf16.xpose.msra.mxu0 0
        %704 = vmatpush.bf16.xpose.msra.mxu0 0
        %705 = vmatpush.bf16.xpose.msra.mxu0 0
        %706 = vmatpush.bf16.xpose.msra.mxu0 0
        %707 = vmatpush.bf16.xpose.msra.mxu0 0
        %708 = vmatpush.bf16.xpose.msra.mxu0 %v699
        %709 = vmatmul.bf16.gmra.mxu0 %v696
        %v710 = vpop.f32.mrf.mxu0
        %v711 = vadd.f32 0.0, %v710
        %v712 = vpop.f32.mrf.mxu0
        %713 = vdwg.mxu0
        %v714 = vsel %vm636, %v711, -inf
        %715 = vmax.xlane.f32.xlu0 %v714
        %v716 = vpop.xlane.xlu0 %715
        %v717 = vsub.f32 %v711, %v716
        %v718 = vmul.f32 %v717, 1.442695
        %v719 = vpow.pop %v718
        %v720 = vsel %vm636, %v719, 0.0
        %721 = vadd.xlane.f32.xlu0 %v720
        %v722 = vpop.xlane.xlu0 %721
        %v723 = vrcp.pop %v722
        %v724 = vmul.f32 %v722, %v723
        %v725 = vsub.f32 1.0, %v724
        %v726 = vmul.f32 %v723, %v725
        %v727 = vadd.f32 %v723, %v726
        %vm728 = vweird.f32 %v722
        %vm729 = vweird.f32 %v723
        %vm730 = vmor %vm728, %vm729
        %v731 = vsel %vm730, %v723, %v727
        %v732 = vand.u32 2147483647, %v722
        %vm733 = vcmp.eq.f32.partialorder %v732, 8.507059e+37
        %v734 = vand.u32 %v722, 2147483648
        %v735 = vor.u32 1.1754944e-38, %v734
        %v736 = vsel %vm733, %v735, %v731
        %v737 = vmul.f32 %v719, %v736
        %v738 = vpack.c.bf16 %v737, %v737
        %v740 = vunpack.c.l.b16 %v615
        %v741 = vpack.c.b16 %v740, %v740
        %742 = vrot.lane.b32.xlu0 %v741, 96
        %v743 = vpop.permute.xlu0 %742
        %v745 = vsel %vm636, %v738, 0
        %v748 = vsel %vm665, %v743, 0
        %750 = vmatpush.bf16.msra.mxu0 0
        %751 = vmatpush.bf16.msra.mxu0 0
        %752 = vmatpush.bf16.msra.mxu0 0
        %753 = vmatpush.bf16.msra.mxu0 0
        %754 = vmatpush.bf16.msra.mxu0 0
        %755 = vmatpush.bf16.msra.mxu0 0
        %756 = vmatpush.bf16.msra.mxu0 0
        %757 = vmatpush.bf16.msra.mxu0 %v748
        %758 = vmatmul.bf16.gmra.mxu0 %v745
        %v759 = vpop.f32.mrf.mxu0
        %v760 = vadd.f32 0.0, %v759
        %v761 = vpop.f32.mrf.mxu0
        %762 = vdwg.mxu0
        %v763 = vpack.c.bf16 %v760, %v760
        %765 = vrot.lane.b32.xlu0 %v763, 32
        %v766 = vpop.permute.xlu0 %765
        %vm768 = vcmask 519424
        %769 = vst.msk [vmem:[#allocation2] sm:$0xf] %vm768, %v766
        %770 = vrot.lane.b32.xlu0 %v687, 64
        %v771 = vpop.permute.xlu0 %770
        %772 = vrot.lane.b32.xlu0 %v692, 64
        %v773 = vpop.permute.xlu0 %772
        %v775 = vsel %vm616, %v771, 0
        %v778 = vsel %vm616, %v773, 0
        %780 = vmatpush.bf16.xpose.msra.mxu0 0
        %781 = vmatpush.bf16.xpose.msra.mxu0 0
        %782 = vmatpush.bf16.xpose.msra.mxu0 0
        %783 = vmatpush.bf16.xpose.msra.mxu0 0
        %784 = vmatpush.bf16.xpose.msra.mxu0 0
        %785 = vmatpush.bf16.xpose.msra.mxu0 0
        %786 = vmatpush.bf16.xpose.msra.mxu0 0
        %787 = vmatpush.bf16.xpose.msra.mxu0 %v778
        %788 = vmatmul.bf16.gmra.mxu0 %v775
        %v789 = vpop.f32.mrf.mxu0
        %v790 = vadd.f32 0.0, %v789
        %v791 = vpop.f32.mrf.mxu0
        %792 = vdwg.mxu0
        %v793 = vsel %vm636, %v790, -inf
        %794 = vmax.xlane.f32.xlu0 %v793
        %v795 = vpop.xlane.xlu0 %794
        %v796 = vsub.f32 %v790, %v795
        %v797 = vmul.f32 %v796, 1.442695
        %v798 = vpow.pop %v797
        %v799 = vsel %vm636, %v798, 0.0
        %800 = vadd.xlane.f32.xlu0 %v799
        %v801 = vpop.xlane.xlu0 %800
        %v802 = vrcp.pop %v801
        %v803 = vmul.f32 %v801, %v802
        %v804 = vsub.f32 1.0, %v803
        %v805 = vmul.f32 %v802, %v804
        %v806 = vadd.f32 %v802, %v805
        %vm807 = vweird.f32 %v801
        %vm808 = vweird.f32 %v802
        %vm809 = vmor %vm807, %vm808
        %v810 = vsel %vm809, %v802, %v806
        %v811 = vand.u32 2147483647, %v801
        %vm812 = vcmp.eq.f32.partialorder %v811, 8.507059e+37
        %v813 = vand.u32 %v801, 2147483648
        %v814 = vor.u32 1.1754944e-38, %v813
        %v815 = vsel %vm812, %v814, %v810
        %v816 = vmul.f32 %v798, %v815
        %v817 = vpack.c.bf16 %v816, %v816
        %818 = vrot.lane.b32.xlu0 %v741, 64
        %v819 = vpop.permute.xlu0 %818
        %v821 = vsel %vm636, %v817, 0
        %v824 = vsel %vm665, %v819, 0
        %826 = vmatpush.bf16.msra.mxu0 0
        %827 = vmatpush.bf16.msra.mxu0 0
        %828 = vmatpush.bf16.msra.mxu0 0
        %829 = vmatpush.bf16.msra.mxu0 0
        %830 = vmatpush.bf16.msra.mxu0 0
        %831 = vmatpush.bf16.msra.mxu0 0
        %832 = vmatpush.bf16.msra.mxu0 0
        %833 = vmatpush.bf16.msra.mxu0 %v824
        %834 = vmatmul.bf16.gmra.mxu0 %v821
        %v835 = vpop.f32.mrf.mxu0
        %v836 = vadd.f32 0.0, %v835
        %v837 = vpop.f32.mrf.mxu0
        %838 = vdwg.mxu0
        %v839 = vpack.c.bf16 %v836, %v836
        %841 = vrot.lane.b32.xlu0 %v839, 64
        %v842 = vpop.permute.xlu0 %841
        %vm844 = vcmask 781824
        %845 = vst.msk [vmem:[#allocation2] sm:$0xf] %vm844, %v842
        %846 = vrot.lane.b32.xlu0 %v687, 32
        %v847 = vpop.permute.xlu0 %846
        %848 = vrot.lane.b32.xlu0 %v692, 32
        %v849 = vpop.permute.xlu0 %848
        %v851 = vsel %vm616, %v847, 0
        %v854 = vsel %vm616, %v849, 0
        %856 = vmatpush.bf16.xpose.msra.mxu0 0
        %857 = vmatpush.bf16.xpose.msra.mxu0 0
        %858 = vmatpush.bf16.xpose.msra.mxu0 0
        %859 = vmatpush.bf16.xpose.msra.mxu0 0
        %860 = vmatpush.bf16.xpose.msra.mxu0 0
        %861 = vmatpush.bf16.xpose.msra.mxu0 0
        %862 = vmatpush.bf16.xpose.msra.mxu0 0
        %863 = vmatpush.bf16.xpose.msra.mxu0 %v854
        %864 = vmatmul.bf16.gmra.mxu0 %v851
        %v865 = vpop.f32.mrf.mxu0
        %v866 = vadd.f32 0.0, %v865
        %v867 = vpop.f32.mrf.mxu0
        %868 = vdwg.mxu0
        %v869 = vsel %vm636, %v866, -inf
        %870 = vmax.xlane.f32.xlu0 %v869
        %v871 = vpop.xlane.xlu0 %870
        %v872 = vsub.f32 %v866, %v871
        %v873 = vmul.f32 %v872, 1.442695
        %v874 = vpow.pop %v873
        %v875 = vsel %vm636, %v874, 0.0
        %876 = vadd.xlane.f32.xlu0 %v875
        %v877 = vpop.xlane.xlu0 %876
        %v878 = vrcp.pop %v877
        %v879 = vmul.f32 %v877, %v878
        %v880 = vsub.f32 1.0, %v879
        %v881 = vmul.f32 %v878, %v880
        %v882 = vadd.f32 %v878, %v881
        %vm883 = vweird.f32 %v877
        %vm884 = vweird.f32 %v878
        %vm885 = vmor %vm883, %vm884
        %v886 = vsel %vm885, %v878, %v882
        %v887 = vand.u32 2147483647, %v877
        %vm888 = vcmp.eq.f32.partialorder %v887, 8.507059e+37
        %v889 = vand.u32 %v877, 2147483648
        %v890 = vor.u32 1.1754944e-38, %v889
        %v891 = vsel %vm888, %v890, %v886
        %v892 = vmul.f32 %v874, %v891
        %v893 = vpack.c.bf16 %v892, %v892
        %894 = vrot.lane.b32.xlu0 %v741, 32
        %v895 = vpop.permute.xlu0 %894
        %v897 = vsel %vm636, %v893, 0
        %v900 = vsel %vm665, %v895, 0
        %902 = vmatpush.bf16.msra.mxu0 0
        %903 = vmatpush.bf16.msra.mxu0 0
        %904 = vmatpush.bf16.msra.mxu0 0
        %905 = vmatpush.bf16.msra.mxu0 0
        %906 = vmatpush.bf16.msra.mxu0 0
        %907 = vmatpush.bf16.msra.mxu0 0
        %908 = vmatpush.bf16.msra.mxu0 0
        %909 = vmatpush.bf16.msra.mxu0 %v900
        %910 = vmatmul.bf16.gmra.mxu0 %v897
        %v911 = vpop.f32.mrf.mxu0
        %v912 = vadd.f32 0.0, %v911
        %v913 = vpop.f32.mrf.mxu0
        %914 = vdwg.mxu0
        %v915 = vpack.c.bf16 %v912, %v912
        %917 = vrot.lane.b32.xlu0 %v915, 96
        %v918 = vpop.permute.xlu0 %917
        %vm920 = vcmask 1044224
        %921 = vst.msk [vmem:[#allocation2] sm:$0xf] %vm920, %v918
        %v922 = vld [vmem:[#allocation2] sm:$0xf]
        %v923 = vld [vmem:[#allocation9] sm:$0xf]
        %v924 = vld [vmem:[#allocation9 + $0x4] sm:$0xf]
        %v925 = vld [vmem:[#allocation9 + $0x8] sm:$0xf]
        %v926 = vld [vmem:[#allocation9 + $0xc] sm:$0xf]
        %v927 = vld [vmem:[#allocation9 + $0x10] sm:$0xf]
        %v928 = vld [vmem:[#allocation9 + $0x14] sm:$0xf]
        %v929 = vld [vmem:[#allocation9 + $0x18] sm:$0xf]
        %v930 = vld [vmem:[#allocation9 + $0x1c] sm:$0xf]
        %v931 = vld [vmem:[#allocation9 + $0x20] sm:$0xf]
        %v932 = vld [vmem:[#allocation9 + $0x24] sm:$0xf]
        %v933 = vld [vmem:[#allocation9 + $0x28] sm:$0xf]
        %v934 = vld [vmem:[#allocation9 + $0x2c] sm:$0xf]
        %v935 = vld [vmem:[#allocation9 + $0x30] sm:$0xf]
        %v936 = vld [vmem:[#allocation9 + $0x34] sm:$0xf]
        %v937 = vld [vmem:[#allocation9 + $0x38] sm:$0xf]
        %v938 = vld [vmem:[#allocation9 + $0x3c] sm:$0xf]
        %v939 = vld [vmem:[%s6] sm:$0x1]
        %v941 = vperm.slane %v939, 0
        %v959 = vunpack.c.l.b16 %v923
        %v960 = vunpack.c.l.b16 %v924
        %v961 = vunpack.c.l.b16 %v925
        %v962 = vunpack.c.l.b16 %v926
        %v963 = vunpack.c.l.b16 %v927
        %v964 = vunpack.c.l.b16 %v928
        %v965 = vunpack.c.l.b16 %v929
        %v966 = vunpack.c.l.b16 %v930
        %v967 = vunpack.c.l.b16 %v931
        %v968 = vunpack.c.l.b16 %v932
        %v969 = vunpack.c.l.b16 %v933
        %v970 = vunpack.c.l.b16 %v934
        %v971 = vunpack.c.l.b16 %v935
        %v972 = vunpack.c.l.b16 %v936
        %v973 = vunpack.c.l.b16 %v937
        %v974 = vunpack.c.l.b16 %v938
        %v975 = vpack.c.b16 %v960, %v959
        %v976 = vpack.c.b16 %v962, %v961
        %v977 = vpack.c.b16 %v964, %v963
        %v978 = vpack.c.b16 %v966, %v965
        %v979 = vpack.c.b16 %v968, %v967
        %v980 = vpack.c.b16 %v970, %v969
        %v981 = vpack.c.b16 %v972, %v971
        %v982 = vpack.c.b16 %v974, %v973
        %991 = vmatpush.bf16.msra.mxu0 %v982
        %992 = vmatpush.bf16.msra.mxu0 %v981
        %993 = vmatpush.bf16.msra.mxu0 %v980
        %994 = vmatpush.bf16.msra.mxu0 %v979
        %995 = vmatpush.bf16.msra.mxu0 %v978
        %996 = vmatpush.bf16.msra.mxu0 %v977
        %997 = vmatpush.bf16.msra.mxu0 %v976
        %998 = vmatpush.bf16.msra.mxu0 %v975
        %999 = vmatmul.bf16.gmra.mxu0 %v922
        %v1000 = vpop.f32.mrf.mxu0
        %v1001 = vadd.f32 %v941, %v1000
        %v1002 = vpop.f32.mrf.mxu0
        %1003 = vdwg.mxu0
        %v1004 = vadd.f32 %v401, %v1001
        %1005 = vadd.xlane.f32.xlu0 %v1004
        %v1006 = vpop.xlane.xlu0 %1005
        %v1007 = vrcp.pop 128.0
        %v1008 = vmul.f32 128.0, %v1007
        %v1009 = vsub.f32 1.0, %v1008
        %v1010 = vmul.f32 %v1007, %v1009
        %v1011 = vadd.f32 %v1007, %v1010
        %vm1012 = vweird.f32 %v1007
        %v1013 = vsel %vm1012, %v1007, %v1011
        %v1014 = vmul.f32 %v1006, %v1013
        %v1015 = vsub.f32 %v1004, %v1014
        %v1016 = vmul.f32 %v1015, %v1015
        %1017 = vadd.xlane.f32.xlu0 %v1016
        %v1018 = vpop.xlane.xlu0 %1017
        %v1019 = vmul.f32 %v1018, %v1013
        %v1020 = vadd.f32 %v1019, 1e-05
        %v1021 = vrsqrt.pop %v1020
        %v1022 = vmul.f32 %v1021, %v1020
        %v1023 = vmul.f32 %v1022, %v1021
        %v1024 = vmul.f32 0.5, %v1023
        %v1025 = vsub.f32 1.5, %v1024
        %v1026 = vmul.f32 %v1021, %v1025
        %vm1027 = vweird.f32 %v1020
        %vm1028 = vweird.f32 %v1021
        %vm1029 = vmor %vm1027, %vm1028
        %v1030 = vsel %vm1029, %v1021, %v1026
        %v1031 = vmul.f32 %v1015, %v1030
        %v1032 = vld [vmem:[%s7] sm:$0x1]
        %v1034 = vperm.slane %v1032, 0
        %v1036 = vmul.f32 %v1031, %v1034
        %v1037 = vld [vmem:[%s8] sm:$0x1]
        %v1039 = vperm.slane %v1037, 0
        %v1041 = vadd.f32 %v1036, %v1039
        %1042 = vst [vmem:[%s399] sm:$0xff] %v1041
        %s1043 = sand.u32 %s230, 1
        %s1044 = scalar_lea.sflag [#allocation5], %s1043
        %s1045 = sand.u32 %s230, 1
        %s1046 = smul.addr %s1045, 8
        %s1047 = scalar_lea.vmem [#allocation11], %s1046
        // Predicated region
        $region73: #{tpu_custom_call.1} parent=55 // pred_check
          %p1048 = pneg %p240
        $region74: #{tpu_custom_call.1} parent=55 // pred_check_branch
          %1050 = sbr.rel (%p1048) target = $region76
        $region75: #{tpu_custom_call.1} parent=55 // pred_region
          %1052 = vsyncadd %s1044, 0
          %s1053 = smul.addr %s28, 8
          %s1054 = scalar_lea.hbm %s9, %s1053
          %s1056 = sshll.u32 %s1047, 4
          %s1057 = int_to_ptr.vmem [resolvable:$true] %s1056
          %s1058 = sshll.u32 %s1054, 4
          %s1059 = int_to_ptr.hbm [resolvable:$true] %s1058
          %1061 = dma.vmem_to_hbm [thread:$0]  %s1057, 128, %s1059, %s1044
        $region76: #{tpu_custom_call.1} parent=55 // pred_fallthru
          _
      $region56: #{tpu_custom_call.1} parent=5 // pred_fallthru
        _
      %p1062 = scmp.le.s32.totalorder 2, %s23
      // Predicated region
      $region77: #{tpu_custom_call.1} parent=5 // pred_check
        %p1063 = pneg %p1062
      $region78: #{tpu_custom_call.1} parent=5 // pred_check_branch
        %1065 = sbr.rel (%p1063) target = $region80
      $region79: #{tpu_custom_call.1} parent=5 // pred_region
        %s1066 = ssub.s32 %s23, 2
        // Predicated region
        $region81: #{tpu_custom_call.1} parent=79 // pred_check
          %p1067 = pneg %p246
        $region82: #{tpu_custom_call.1} parent=79 // pred_check_branch
          %1069 = sbr.rel (%p1067) target = $region84
        $region83: #{tpu_custom_call.1} parent=79 // pred_region
          %s1070 = sand.u32 %s231, 1
          %s1071 = scalar_lea.sflag [#allocation5], %s1070
          %s1072 = sand.u32 %s231, 1
          %s1073 = smul.addr %s1072, 8
          %s1074 = scalar_lea.vmem [#allocation11], %s1073
          %1076 = dma.done %s1071, 128
        $region84: #{tpu_custom_call.1} parent=79 // pred_fallthru
          _
      $region80: #{tpu_custom_call.1} parent=5 // pred_fallthru
        _
    $region6: #{tpu_custom_call.1} parent=1 // loop_footer
      %s27 = sadd.s32 1, %s23
    $region7: #{tpu_custom_call.1} parent=1 // loop_footer_branch
      %22 = sbr.rel target = $region3
    $region8: #{tpu_custom_call.1} parent=1 // loop_exit
      _
    %1077 = vsyncpa [#allocation4], 1
    %s1078 = scalar_lea.sflag [#allocation4], 1
    %1079 = vsyncpa %s1078, 1
    %1080 = vsyncpa [#allocation7], 1
    %1081 = vsyncpa [#allocation10], 1
    %1082 = vsyncpa [#allocation5], 1
    %s1083 = scalar_lea.sflag [#allocation5], 1
    %1084 = vsyncpa %s1083, 1

</llo_original>
